<compile_context>
chip_gen: v6e
topology: v6e:2x2x1
jax: 0.10.0
libtpu: 0.0.40
codegen_flags: <defaults>
</compile_context>

<pallas_src>
from functools import partial

import jax
import jax.numpy as jnp
from jax import lax
from jax.experimental import pallas as pl
from jax.experimental.pallas import tpu as pltpu


def _round_up(x, m):
    return (x + m - 1) // m * m


def _vmem_limit_bytes():
    # Generation-aware: ~3/4 of physical VMEM (48 MiB-class on v7x's 64 MiB,
    # ~96 MiB on v5e/v6e's 128 MiB). Falls back to a safe 48 MiB everywhere.
    try:
        cap = int(pltpu.get_tpu_info().vmem_capacity_bytes)
    except Exception:
        cap = 64 << 20
    return max(32 << 20, (cap * 3) // 4)


# ----------------------------------------------------------------------------
# Kernel 1: feature encoder  (Linear -> LeakyReLU -> Linear), row-tiled
# ----------------------------------------------------------------------------
def encoder_kernel(feat_ref, w1_ref, b1_ref, w2_ref, b2_ref, out_ref):
    # bf16 operands on the MXU, f32 accumulation; element-wise math in f32.
    h = jnp.dot(feat_ref[...], w1_ref[...], preferred_element_type=jnp.float32)
    h = h + b1_ref[...]
    h = jnp.where(h > 0, h, 0.01 * h)  # F.leaky_relu default negative_slope=0.01
    o = jnp.dot(h.astype(jnp.bfloat16), w2_ref[...],
                preferred_element_type=jnp.float32) + b2_ref[...]
    out_ref[...] = o.astype(out_ref.dtype)


def encoder_pallas(feature, w1, b1, w2, b2):
    n, dim_feat = feature.shape
    hidden = w1.shape[1]
    dim_e = w2.shape[1]
    vmem_limit = _vmem_limit_bytes()

    # Pad contraction / output dims to 128 lanes (zero padding is exact).
    df_p = _round_up(dim_feat, 128)
    h_p = _round_up(hidden, 128)
    de_p = _round_up(dim_e, 128)

    # Row tile: multiple of 16 (bf16 native sublane tile); ~512 rows per step.
    tm = min(512, _round_up(n, 16))
    n_p = _round_up(n, tm)

    feat_p = jnp.pad(feature, ((0, n_p - n), (0, df_p - dim_feat))).astype(jnp.bfloat16)
    w1_p = jnp.pad(w1, ((0, df_p - dim_feat), (0, h_p - hidden))).astype(jnp.bfloat16)
    b1_p = jnp.pad(b1, ((0, 0), (0, h_p - hidden))).astype(jnp.float32)
    w2_p = jnp.pad(w2, ((0, h_p - hidden), (0, de_p - dim_e))).astype(jnp.bfloat16)
    b2_p = jnp.pad(b2, ((0, 0), (0, de_p - dim_e))).astype(jnp.float32)

    def build(single_buffer_weights):
        # Weights/biases have constant index maps -> fetched once; single-buffer
        # them to free VMEM (most valuable on v7x's 64 MiB).
        wkw = dict(pipeline_mode=pl.Buffered(1)) if single_buffer_weights else {}
        return pl.pallas_call(
            encoder_kernel,
            out_shape=jax.ShapeDtypeStruct((n_p, de_p), jnp.float32),
            grid_spec=pltpu.PrefetchScalarGridSpec(
                num_scalar_prefetch=0,
                grid=(n_p // tm,),
                in_specs=[
                    pl.BlockSpec((tm, df_p), lambda i: (i, 0)),
                    pl.BlockSpec((df_p, h_p), lambda i: (0, 0), **wkw),
                    pl.BlockSpec((1, h_p), lambda i: (0, 0), **wkw),
                    pl.BlockSpec((h_p, de_p), lambda i: (0, 0), **wkw),
                    pl.BlockSpec((1, de_p), lambda i: (0, 0), **wkw),
                ],
                out_specs=pl.BlockSpec((tm, de_p), lambda i: (i, 0)),
            ),
            compiler_params=pltpu.CompilerParams(
                dimension_semantics=("parallel",),   # 2 TCs on v7x shard the row axis
                vmem_limit_bytes=vmem_limit),
        )

    try:
        out = build(True)(feat_p, w1_p, b1_p, w2_p, b2_p)
    except Exception:
        # Fallback if this JAX build rejects Buffered(1) pipeline mode.
        out = build(False)(feat_p, w1_p, b1_p, w2_p, b2_p)
    return out[:n, :dim_e]


# ----------------------------------------------------------------------------
# Kernel 2: contrastive losses + reg loss
#   grid = (2, nt): leading "parallel" axis splits batch tiles across the two
#   v7x TensorCores (no-op on v5e/v6e); inner "arbitrary" axis accumulates
#   per-core partial sums in SMEM and writes them to out[core] on the last step.
#   Final means / lambda mixing are done in the JAX wrapper.
# ----------------------------------------------------------------------------
def loss_kernel(pe_ref, af_ref, ue_ref, ae_ref, sub_ref, out_ref, acc_ref, *,
                temp_value, batch_total, tb, nt):
    c = pl.program_id(0)   # core / batch half
    i = pl.program_id(1)   # tile within this half

    @pl.when(i == 0)
    def _():
        acc_ref[0] = jnp.float32(0.0)
        acc_ref[1] = jnp.float32(0.0)
        acc_ref[2] = jnp.float32(0.0)

    inv_temp = 1.0 / temp_value

    # Mask rows that were added by batch padding.
    row = (c * nt + i) * tb + lax.broadcasted_iota(jnp.int32, (tb, 1), 0)  # (tb, 1)
    valid = (row < batch_total).astype(jnp.float32)                        # (tb, 1)

    pe = pe_ref[...]    # (tb, 1, D)  positive item embedding (broadcast over K)
    af = af_ref[...]    # (tb, K, D)  item content features
    ue = ue_ref[...]    # (tb, K, D)  user embeddings
    ae = ae_ref[...]    # (tb, K, D)  item id embeddings
    sub = sub_ref[...]  # (tb, K, 1)  1.0 where feature substitutes the embedding

    # all_item_input (random feature substitution) built in-kernel.
    ai = sub * af + (1.0 - sub) * ae

    def l2_normalize(x):
        ss = jnp.sum(x * x, axis=-1, keepdims=True)
        return x * lax.rsqrt(jnp.maximum(ss, 1e-24))   # == x / max(||x||, 1e-12)

    def neg_log_softmax_pos(s):
        # s: (tb, K) scores, positive in column 0.
        # -log(exp(s0)/sum_j exp(sj)) == logsumexp(s) - s0  (max-subtracted, stable)
        m = jnp.max(s, axis=-1, keepdims=True)
        lse = jnp.log(jnp.sum(jnp.exp(s - m), axis=-1, keepdims=True)) + m
        return lse - s[:, 0:1]                                             # (tb, 1)

    s1 = jnp.sum(l2_normalize(pe) * l2_normalize(af), axis=-1) * inv_temp  # (tb, K)
    s2 = jnp.sum(ue * ai, axis=-1) * inv_temp                              # (tb, K)
    nl1 = neg_log_softmax_pos(s1)
    nl2 = neg_log_softmax_pos(s2)

    norms = jnp.sqrt(jnp.sum(ue * ue, axis=-1)) + jnp.sqrt(jnp.sum(ae * ae, axis=-1))

    acc_ref[0] = acc_ref[0] + jnp.sum(nl1 * valid)
    acc_ref[1] = acc_ref[1] + jnp.sum(nl2 * valid)
    acc_ref[2] = acc_ref[2] + jnp.sum(norms * valid)

    @pl.when(i == nt - 1)
    def _():
        out_ref[0, 0, 0] = acc_ref[0]
        out_ref[0, 0, 1] = acc_ref[1]
        out_ref[0, 0, 2] = acc_ref[2]


def _loss_tiles(B, K, D, vmem_limit):
    # Bytes per batch row across the 5 operand blocks (af/ue/ae + pe + mask).
    bytes_per_row = (3 * K * D + D + K) * 4
    budget = max(vmem_limit // 3, 1 << 20)        # operand blocks, double-buffered
    tb = max(8, (budget // (2 * bytes_per_row) // 8) * 8)
    tb = min(tb, _round_up(pl.cdiv(B, 2), 8))     # at most half the batch per block
    ntiles = pl.cdiv(B, tb)
    nt = pl.cdiv(ntiles, 2)                        # tiles per core
    tb = min(tb, _round_up(pl.cdiv(B, 2 * nt), 8)) # shrink tb to minimize padding
    Bp = 2 * nt * tb
    return tb, nt, Bp


def losses_pallas(pos_item_emb, all_item_feat, user_emb, all_item_emb, sub_mask,
                  *, temp_value, lr_lambda):
    B, K, D = user_emb.shape
    vmem_limit = _vmem_limit_bytes()
    tb, nt, Bp = _loss_tiles(B, K, D, vmem_limit)

    def pad_b(x):
        if x.shape[0] == Bp:
            return x
        return jnp.pad(x, ((0, Bp - x.shape[0]), (0, 0), (0, 0)))

    pe = pad_b(pos_item_emb)    # (Bp, 1, D)
    af = pad_b(all_item_feat)   # (Bp, K, D)
    ue = pad_b(user_emb)        # (Bp, K, D)
    ae = pad_b(all_item_emb)    # (Bp, K, D)
    sm = pad_b(sub_mask)        # (Bp, K, 1)

    bmap = lambda c, i: (c * nt + i, 0, 0)
    kern = partial(loss_kernel, temp_value=float(temp_value),
                   batch_total=B, tb=tb, nt=nt)

    partials = pl.pallas_call(
        kern,
        out_shape=jax.ShapeDtypeStruct((2, 1, 3), jnp.float32),
        grid_spec=pltpu.PrefetchScalarGridSpec(
            num_scalar_prefetch=0,
            grid=(2, nt),
            in_specs=[
                pl.BlockSpec((tb, 1, D), bmap),
                pl.BlockSpec((tb, K, D), bmap),
                pl.BlockSpec((tb, K, D), bmap),
                pl.BlockSpec((tb, K, D), bmap),
                pl.BlockSpec((tb, K, 1), bmap),
            ],
            out_specs=pl.BlockSpec((1, 1, 3), lambda c, i: (c, 0, 0),
                                   memory_space=pltpu.MemorySpace.SMEM),
            scratch_shapes=[pltpu.SMEM((3,), jnp.float32)],
        ),
        compiler_params=pltpu.CompilerParams(
            dimension_semantics=("parallel", "arbitrary"),
            vmem_limit_bytes=vmem_limit),
    )(pe, af, ue, ae, sm)

    s = jnp.sum(partials.reshape(2, 3), axis=0)            # reduce the 2 core partials
    contrastive_loss = (s[0] * lr_lambda + s[1] * (1.0 - lr_lambda)) / B
    reg_loss = s[2] / (2.0 * B * K)
    return contrastive_loss, reg_loss


# ----------------------------------------------------------------------------
# Parameter setup (deterministic, synthetic)
# ----------------------------------------------------------------------------
def init_params(key, num_user, num_item, dim_E, dv, da, dt, hidden=256):
    ks = jax.random.split(key, 8)
    dim_feat = dv + da + dt

    def xavier(k, shape):
        fan_out, fan_in = shape
        std = jnp.sqrt(2.0 / (fan_in + fan_out))
        return std * jax.random.normal(k, shape, jnp.float32)

    def l2norm(x, eps=1e-12):
        n = jnp.sqrt(jnp.sum(x * x, axis=1, keepdims=True))
        return x / jnp.maximum(n, eps)

    params = dict(
        id_embedding=xavier(ks[0], (num_user + num_item, dim_E)),
        v_feat=l2norm(jax.random.normal(ks[1], (num_item, dv), jnp.float32)),
        a_feat=l2norm(jax.random.normal(ks[2], (num_item, da), jnp.float32)),
        t_feat=l2norm(jax.random.normal(ks[3], (num_item, dt), jnp.float32)),
        enc_w1=xavier(ks[4], (dim_feat, hidden)),
        enc_b1=jnp.zeros((1, hidden), jnp.float32),
        enc_w2=xavier(ks[5], (hidden, dim_E)),
        enc_b2=jnp.zeros((1, dim_E), jnp.float32),
    )
    # TODO(synk): MLP / att_weight_1 / att_weight_2 / bias / att_sum_layer exist in
    # __init__ but are never used in forward(); omitted here.
    return params


# ----------------------------------------------------------------------------
# Forward pass wrapper (mirrors CLCRec.forward)
# ----------------------------------------------------------------------------
def clcrec_forward(params, user_tensor, item_tensor, *, num_user, num_warm_item,
                   num_neg, temp_value, lr_lambda, num_sample, rng_key):
    K = 1 + num_neg
    B = user_tensor.shape[0]
    D = params["id_embedding"].shape[1]

    user_flat = user_tensor.reshape(-1)
    item_flat = item_tensor.reshape(-1)

    # encoder(): concat(v, a, t) -> Linear -> LeakyReLU -> Linear   (Pallas)
    feature_in = jnp.concatenate(
        [params["v_feat"], params["a_feat"], params["t_feat"]], axis=1)
    feature = encoder_pallas(feature_in, params["enc_w1"], params["enc_b1"],
                             params["enc_w2"], params["enc_b2"])

    # embedding / feature gathers (glue)
    # TODO(synk): fusing these row gathers into the loss kernel (scalar-prefetched
    # indices + manual DMA gather) would remove one HBM write+read pass per operand.
    all_item_feat_flat = feature[item_flat - num_user]                 # (B*K, D)
    user_embedding_flat = params["id_embedding"][user_flat]            # (B*K, D)
    all_item_embedding_flat = params["id_embedding"][item_flat]        # (B*K, D)
    # positive item embedding: NOT repeated K times -> (B, 1, D), broadcast in-kernel
    pos_item_embedding = params["id_embedding"][item_tensor[:, 0]].reshape(B, 1, D)

    # random substitution of item embeddings by content features: only the 0/1
    # selection mask is materialized; the substitution itself happens in-kernel.
    N = B * K
    n_sample = int(N * num_sample)
    rand_index = jax.random.randint(rng_key, (n_sample,), 0, N)
    sub_mask = jnp.zeros((N,), jnp.float32).at[rand_index].set(1.0).reshape(B, K, 1)

    to3 = lambda x: x.reshape(B, K, D)
    contrastive_loss, reg_loss = losses_pallas(
        pos_item_embedding, to3(all_item_feat_flat), to3(user_embedding_flat),
        to3(all_item_embedding_flat), sub_mask,
        temp_value=temp_value, lr_lambda=lr_lambda)

    # self.result side effect (glue)
    result = jnp.concatenate(
        [params["id_embedding"][: num_user + num_warm_item],
         feature[num_warm_item:]], axis=0)

    return contrastive_loss, reg_loss, result


# ----------------------------------------------------------------------------
if __name__ == "__main__":
    num_user, num_item, num_warm_item = 6, 8, 5
    dim_E, num_neg, B = 32, 4, 2
    temp_value, lr_lambda, num_sample = 2.0, 0.5, 0.5
    dv, da, dt = 16, 8, 12

    root = jax.random.PRNGKey(0)
    k_par, k_u, k_i, k_rand = jax.random.split(root, 4)

    params = init_params(k_par, num_user, num_item, dim_E, dv, da, dt)

    K = 1 + num_neg
    user_tensor = jax.random.randint(k_u, (B, K), 0, num_user, jnp.int32)
    item_tensor = jax.random.randint(k_i, (B, K), num_user, num_user + num_item,
                                     jnp.int32)

    contrastive_loss, reg_loss, result = clcrec_forward(
        params, user_tensor, item_tensor,
        num_user=num_user, num_warm_item=num_warm_item, num_neg=num_neg,
        temp_value=temp_value, lr_lambda=lr_lambda, num_sample=num_sample,
        rng_key=k_rand)

    jax.block_until_ready((contrastive_loss, reg_loss, result))
    assert jnp.isfinite(contrastive_loss) and jnp.isfinite(reg_loss)
    assert result.shape == (num_user + num_item, dim_E)
    print("KERNEL_OK")
</pallas_src>

<mosaic_0001>
module attributes {stable_mosaic.version = 11 : i64} {
  func.func @encoder_kernel(%arg0: i32, %arg1: memref<16x128xbf16, #tpu.memory_space<vmem>>, %arg2: memref<128x256xbf16, #tpu.memory_space<vmem>>, %arg3: memref<1x256xf32, #tpu.memory_space<vmem>>, %arg4: memref<256x128xbf16, #tpu.memory_space<vmem>>, %arg5: memref<1x128xf32, #tpu.memory_space<vmem>>, %arg6: memref<16x128xf32, #tpu.memory_space<vmem>>) attributes {dimension_semantics = [#tpu.dimension_semantics<parallel>], iteration_bounds = array<i64: 1>, scalar_prefetch = 0 : i64, scratch_operands = 0 : i64, tpu.core_type = #tpu.core_type<tc>, window_params = [{transform_indices = @transform_0, window_bounds = array<i64: 16, 128>}, {pipeline_mode = #tpu.pipeline_mode<synchronous>, transform_indices = @transform_1, window_bounds = array<i64: 128, 256>}, {pipeline_mode = #tpu.pipeline_mode<synchronous>, transform_indices = @transform_2, window_bounds = array<i64: 1, 256>}, {pipeline_mode = #tpu.pipeline_mode<synchronous>, transform_indices = @transform_3, window_bounds = array<i64: 256, 128>}, {pipeline_mode = #tpu.pipeline_mode<synchronous>, transform_indices = @transform_4, window_bounds = array<i64: 1, 128>}, {transform_indices = @transform_5, window_bounds = array<i64: 16, 128>}]} {
    %c0 = arith.constant 0 : index
    %c0_0 = arith.constant 0 : index
    %0 = vector.load %arg1[%c0, %c0_0] : memref<16x128xbf16, #tpu.memory_space<vmem>>, vector<16x128xbf16>
    %c0_1 = arith.constant 0 : index
    %c0_2 = arith.constant 0 : index
    %1 = vector.load %arg2[%c0_1, %c0_2] : memref<128x256xbf16, #tpu.memory_space<vmem>>, vector<128x256xbf16>
    %cst = arith.constant dense<0.000000e+00> : vector<16x256xf32>
    %2 = tpu.matmul %0, %1, %cst {dimension_numbers = #tpu.dot_dimension_numbers<[1], [0], [0], [1], [0, 0, 1, 1], [], []>} : vector<16x128xbf16>, vector<128x256xbf16>, vector<16x256xf32> -> vector<16x256xf32>
    %c0_3 = arith.constant 0 : index
    %c0_4 = arith.constant 0 : index
    %3 = vector.load %arg3[%c0_3, %c0_4] : memref<1x256xf32, #tpu.memory_space<vmem>>, vector<1x256xf32>
    %4 = vector.broadcast %3 : vector<1x256xf32> to vector<16x256xf32>
    %5 = arith.addf %2, %4 : vector<16x256xf32>
    %cst_5 = arith.constant 0.000000e+00 : f32
    %6 = vector.broadcast %cst_5 : f32 to vector<16x256xf32>
    %7 = arith.cmpf ogt, %5, %6 : vector<16x256xf32>
    %cst_6 = arith.constant 0.00999999977 : f32
    %8 = vector.broadcast %cst_6 : f32 to vector<16x256xf32>
    %9 = arith.mulf %8, %5 : vector<16x256xf32>
    %10 = arith.select %7, %5, %9 : vector<16x256xi1>, vector<16x256xf32>
    %11 = arith.truncf %10 : vector<16x256xf32> to vector<16x256xbf16>
    %c0_7 = arith.constant 0 : index
    %c0_8 = arith.constant 0 : index
    %12 = vector.load %arg4[%c0_7, %c0_8] : memref<256x128xbf16, #tpu.memory_space<vmem>>, vector<256x128xbf16>
    %cst_9 = arith.constant dense<0.000000e+00> : vector<16x128xf32>
    %13 = tpu.matmul %11, %12, %cst_9 {dimension_numbers = #tpu.dot_dimension_numbers<[1], [0], [0], [1], [0, 0, 1, 1], [], []>} : vector<16x256xbf16>, vector<256x128xbf16>, vector<16x128xf32> -> vector<16x128xf32>
    %c0_10 = arith.constant 0 : index
    %c0_11 = arith.constant 0 : index
    %14 = vector.load %arg5[%c0_10, %c0_11] : memref<1x128xf32, #tpu.memory_space<vmem>>, vector<1x128xf32>
    %15 = vector.broadcast %14 : vector<1x128xf32> to vector<16x128xf32>
    %16 = arith.addf %13, %15 : vector<16x128xf32>
    %c0_12 = arith.constant 0 : index
    %c0_13 = arith.constant 0 : index
    %17 = vector.load %arg6[%c0_12, %c0_13] : memref<16x128xf32, #tpu.memory_space<vmem>>, vector<16x128xf32>
    tpu.vector_store %arg6[%c0_12, %c0_13], %16 {strides = array<i32>} : memref<16x128xf32, #tpu.memory_space<vmem>>, vector<16x128xf32>,
    return
  }
  func.func @transform_0(%arg0: i32) -> (i32, i32) {
    %c0_i32 = arith.constant 0 : i32
    %c0_i32_0 = arith.constant 0 : i32
    return %arg0, %c0_i32 : i32, i32
  }
  func.func @transform_1(%arg0: i32) -> (i32, i32) {
    %c0_i32 = arith.constant 0 : i32
    %c0_i32_0 = arith.constant 0 : i32
    %c0_i32_1 = arith.constant 0 : i32
    return %c0_i32, %c0_i32_0 : i32, i32
  }
  func.func @transform_2(%arg0: i32) -> (i32, i32) {
    %c0_i32 = arith.constant 0 : i32
    %c0_i32_0 = arith.constant 0 : i32
    %c0_i32_1 = arith.constant 0 : i32
    return %c0_i32, %c0_i32_0 : i32, i32
  }
  func.func @transform_3(%arg0: i32) -> (i32, i32) {
    %c0_i32 = arith.constant 0 : i32
    %c0_i32_0 = arith.constant 0 : i32
    %c0_i32_1 = arith.constant 0 : i32
    return %c0_i32, %c0_i32_0 : i32, i32
  }
  func.func @transform_4(%arg0: i32) -> (i32, i32) {
    %c0_i32 = arith.constant 0 : i32
    %c0_i32_0 = arith.constant 0 : i32
    %c0_i32_1 = arith.constant 0 : i32
    return %c0_i32, %c0_i32_0 : i32, i32
  }
  func.func @transform_5(%arg0: i32) -> (i32, i32) {
    %c0_i32 = arith.constant 0 : i32
    %c0_i32_0 = arith.constant 0 : i32
    return %arg0, %c0_i32 : i32, i32
  }
}

module attributes {stable_mosaic.version = 11 : i64} {
  func.func @encoder_kernel(%arg0: i32, %arg1: memref<16x128xbf16, #tpu.memory_space<vmem>>, %arg2: memref<128x256xbf16, #tpu.memory_space<vmem>>, %arg3: memref<1x256xf32, #tpu.memory_space<vmem>>, %arg4: memref<256x128xbf16, #tpu.memory_space<vmem>>, %arg5: memref<1x128xf32, #tpu.memory_space<vmem>>, %arg6: memref<16x128xf32, #tpu.memory_space<vmem>>) attributes {dimension_semantics = [#tpu.dimension_semantics<parallel>], iteration_bounds = array<i64: 1>, scalar_prefetch = 0 : i64, scratch_operands = 0 : i64, tpu.core_type = #tpu.core_type<tc>, window_params = [{transform_indices = @transform_0, window_bounds = array<i64: 16, 128>}, {pipeline_mode = #tpu.pipeline_mode<synchronous>, transform_indices = @transform_1, window_bounds = array<i64: 128, 256>}, {pipeline_mode = #tpu.pipeline_mode<synchronous>, transform_indices = @transform_2, window_bounds = array<i64: 1, 256>}, {pipeline_mode = #tpu.pipeline_mode<synchronous>, transform_indices = @transform_3, window_bounds = array<i64: 256, 128>}, {pipeline_mode = #tpu.pipeline_mode<synchronous>, transform_indices = @transform_4, window_bounds = array<i64: 1, 128>}, {transform_indices = @transform_5, window_bounds = array<i64: 16, 128>}]} {
    %c0 = arith.constant 0 : index
    %c0_0 = arith.constant 0 : index
    %0 = vector.load %arg1[%c0, %c0_0] : memref<16x128xbf16, #tpu.memory_space<vmem>>, vector<16x128xbf16>
    %c0_1 = arith.constant 0 : index
    %c0_2 = arith.constant 0 : index
    %1 = vector.load %arg2[%c0_1, %c0_2] : memref<128x256xbf16, #tpu.memory_space<vmem>>, vector<128x256xbf16>
    %cst = arith.constant dense<0.000000e+00> : vector<16x256xf32>
    %2 = tpu.matmul %0, %1, %cst {dimension_numbers = #tpu.dot_dimension_numbers<[1], [0], [0], [1], [0, 0, 1, 1], [], []>} : vector<16x128xbf16>, vector<128x256xbf16>, vector<16x256xf32> -> vector<16x256xf32>
    %c0_3 = arith.constant 0 : index
    %c0_4 = arith.constant 0 : index
    %3 = vector.load %arg3[%c0_3, %c0_4] : memref<1x256xf32, #tpu.memory_space<vmem>>, vector<1x256xf32>
    %4 = vector.broadcast %3 : vector<1x256xf32> to vector<16x256xf32>
    %5 = arith.addf %2, %4 : vector<16x256xf32>
    %cst_5 = arith.constant 0.000000e+00 : f32
    %6 = vector.broadcast %cst_5 : f32 to vector<16x256xf32>
    %7 = arith.cmpf ogt, %5, %6 : vector<16x256xf32>
    %cst_6 = arith.constant 0.00999999977 : f32
    %8 = vector.broadcast %cst_6 : f32 to vector<16x256xf32>
    %9 = arith.mulf %8, %5 : vector<16x256xf32>
    %10 = arith.select %7, %5, %9 : vector<16x256xi1>, vector<16x256xf32>
    %11 = arith.truncf %10 : vector<16x256xf32> to vector<16x256xbf16>
    %c0_7 = arith.constant 0 : index
    %c0_8 = arith.constant 0 : index
    %12 = vector.load %arg4[%c0_7, %c0_8] : memref<256x128xbf16, #tpu.memory_space<vmem>>, vector<256x128xbf16>
    %cst_9 = arith.constant dense<0.000000e+00> : vector<16x128xf32>
    %13 = tpu.matmul %11, %12, %cst_9 {dimension_numbers = #tpu.dot_dimension_numbers<[1], [0], [0], [1], [0, 0, 1, 1], [], []>} : vector<16x256xbf16>, vector<256x128xbf16>, vector<16x128xf32> -> vector<16x128xf32>
    %c0_10 = arith.constant 0 : index
    %c0_11 = arith.constant 0 : index
    %14 = vector.load %arg5[%c0_10, %c0_11] : memref<1x128xf32, #tpu.memory_space<vmem>>, vector<1x128xf32>
    %15 = vector.broadcast %14 : vector<1x128xf32> to vector<16x128xf32>
    %16 = arith.addf %13, %15 : vector<16x128xf32>
    %c0_12 = arith.constant 0 : index
    %c0_13 = arith.constant 0 : index
    %17 = vector.load %arg6[%c0_12, %c0_13] : memref<16x128xf32, #tpu.memory_space<vmem>>, vector<16x128xf32>
    tpu.vector_store %arg6[%c0_12, %c0_13], %16 {strides = array<i32>} : memref<16x128xf32, #tpu.memory_space<vmem>>, vector<16x128xf32>,
    return
  }
  func.func @transform_0(%arg0: i32) -> (i32, i32) {
    %c0_i32 = arith.constant 0 : i32
    %c0_i32_0 = arith.constant 0 : i32
    return %arg0, %c0_i32 : i32, i32
  }
  func.func @transform_1(%arg0: i32) -> (i32, i32) {
    %c0_i32 = arith.constant 0 : i32
    %c0_i32_0 = arith.constant 0 : i32
    %c0_i32_1 = arith.constant 0 : i32
    return %c0_i32, %c0_i32_0 : i32, i32
  }
  func.func @transform_2(%arg0: i32) -> (i32, i32) {
    %c0_i32 = arith.constant 0 : i32
    %c0_i32_0 = arith.constant 0 : i32
    %c0_i32_1 = arith.constant 0 : i32
    return %c0_i32, %c0_i32_0 : i32, i32
  }
  func.func @transform_3(%arg0: i32) -> (i32, i32) {
    %c0_i32 = arith.constant 0 : i32
    %c0_i32_0 = arith.constant 0 : i32
    %c0_i32_1 = arith.constant 0 : i32
    return %c0_i32, %c0_i32_0 : i32, i32
  }
  func.func @transform_4(%arg0: i32) -> (i32, i32) {
    %c0_i32 = arith.constant 0 : i32
    %c0_i32_0 = arith.constant 0 : i32
    %c0_i32_1 = arith.constant 0 : i32
    return %c0_i32, %c0_i32_0 : i32, i32
  }
  func.func @transform_5(%arg0: i32) -> (i32, i32) {
    %c0_i32 = arith.constant 0 : i32
    %c0_i32_0 = arith.constant 0 : i32
    return %arg0, %c0_i32 : i32, i32
  }
}

</mosaic_0001>

<llo_original>
// kernel: tpu_custom_call.1
$region0: #{tpu_custom_call.1}
  #allocation0 [shape = 'u32[]', space=smem, size = 0x4, offset = 0x4, fixed_abs, tag = 'smem constant byte address 0x4 - core index']
  #allocation1 [shape = 'u32[144,128]{1,0:T(1,128)}', space=vmem, size = 0x12000, scoped, tag = 'internal scratch']
  %s0 = inlined_call_operand.hbm [shape: bf16[16,128], index: 0, kind: input, shape index: {}]
  %s1 = inlined_call_operand.hbm [shape: bf16[128,256], index: 1, kind: input, shape index: {}]
  %s2 = inlined_call_operand.vmem [shape: f32[1,256], index: 2, kind: input, shape index: {}]
  %s3 = inlined_call_operand.hbm [shape: bf16[256,128], index: 3, kind: input, shape index: {}]
  %s4 = inlined_call_operand.vmem [shape: f32[1,128], index: 4, kind: input, shape index: {}]
  %s5 = inlined_call_operand.hbm [shape: f32[16,128], index: 5, kind: output, shape index: {}]
  %s6 = sld [smem:[#allocation0]]
  $region42: #{tpu_custom_call.1} parent=0
    _
  %s8 = ssub.s32 1, %s6
  %s9 = scalar_select 0, %s8, %s6
  $region1: #{tpu_custom_call.1} parent=0
    #allocation2 [shape = 'u8[4096]{0}', space=vmem, size = 0x1000, scoped, tag = 'input window, operand 0, single buffered']
    #allocation3 [shape = 's32[1]{0}', space=sflag, size = 0x4, scoped, tag = 'scoped memory for tpu_custom_call.1']
    #allocation4 [shape = 's32[1]{0}', space=sflag, size = 0x4, scoped, tag = 'scoped memory for tpu_custom_call.1']
    #allocation5 [shape = 'u8[65536]{0}', space=vmem, size = 0x10000, scoped, tag = 'input window, operand 1, single buffered']
    #allocation6 [shape = 's32[1]{0}', space=sflag, size = 0x4, scoped, tag = 'scoped memory for tpu_custom_call.1']
    #allocation7 [shape = 'u8[65536]{0}', space=vmem, size = 0x10000, scoped, tag = 'input window, operand 3, single buffered']
    #allocation8 [shape = 'u8[8192]{0}', space=vmem, size = 0x2000, scoped, tag = 'output window, operand 0, single buffered']
    %10 = vsyncpa [#allocation3], 0
    %11 = vsyncpa [#allocation6], 0
    %12 = vsyncpa [#allocation4], 0
    // Predicated region
    $region2: #{tpu_custom_call.1} parent=1 // pred_check
      _
    $region3: #{tpu_custom_call.1} parent=1 // pred_check_branch
      %14 = sbr.rel (0) target = $region5
    $region4: #{tpu_custom_call.1} parent=1 // pred_region
      %s16 = ssub.s32 128, 128
      %17 = vsyncadd [#allocation3], %s16
      %s18 = sshll.u32 [#allocation2], 4
      %s19 = int_to_ptr.vmem [resolvable:$true] %s18
      %24 = dma.hbm_to_vmem [thread:$0]  %s0, 128, %s19, [#allocation3], 64, 64, 4
    $region5: #{tpu_custom_call.1} parent=1 // pred_fallthru
      _
    // Predicated region
    $region6: #{tpu_custom_call.1} parent=1 // pred_check
      _
    $region7: #{tpu_custom_call.1} parent=1 // pred_check_branch
      %26 = sbr.rel (0) target = $region9
    $region8: #{tpu_custom_call.1} parent=1 // pred_region
      %s28 = ssub.s32 2048, 2048
      %29 = vsyncadd [#allocation6], %s28
      %s30 = sshll.u32 [#allocation5], 4
      %s31 = int_to_ptr.vmem [resolvable:$true] %s30
      %36 = dma.hbm_to_vmem [thread:$0]  %s1, 2048, %s31, [#allocation6], 128, 128, 8
    $region9: #{tpu_custom_call.1} parent=1 // pred_fallthru
      _
    // Predicated region
    $region10: #{tpu_custom_call.1} parent=1 // pred_check
      _
    $region11: #{tpu_custom_call.1} parent=1 // pred_check_branch
      %38 = sbr.rel (0) target = $region13
    $region12: #{tpu_custom_call.1} parent=1 // pred_region
      _
    $region13: #{tpu_custom_call.1} parent=1 // pred_fallthru
      _
    // Predicated region
    $region14: #{tpu_custom_call.1} parent=1 // pred_check
      _
    $region15: #{tpu_custom_call.1} parent=1 // pred_check_branch
      %40 = sbr.rel (0) target = $region17
    $region16: #{tpu_custom_call.1} parent=1 // pred_region
      %s42 = ssub.s32 2048, 2048
      %43 = vsyncadd [#allocation6], %s42
      %s44 = sshll.u32 [#allocation7], 4
      %s45 = int_to_ptr.vmem [resolvable:$true] %s44
      %50 = dma.hbm_to_vmem [thread:$0]  %s3, 2048, %s45, [#allocation6], 64, 64, 4
    $region17: #{tpu_custom_call.1} parent=1 // pred_fallthru
      _
    // Predicated region
    $region18: #{tpu_custom_call.1} parent=1 // pred_check
      _
    $region19: #{tpu_custom_call.1} parent=1 // pred_check_branch
      %52 = sbr.rel (0) target = $region21
    $region20: #{tpu_custom_call.1} parent=1 // pred_region
      _
    $region21: #{tpu_custom_call.1} parent=1 // pred_fallthru
      _
    // Predicated region
    $region22: #{tpu_custom_call.1} parent=1 // pred_check
      _
    $region23: #{tpu_custom_call.1} parent=1 // pred_check_branch
      %54 = sbr.rel (0) target = $region25
    $region24: #{tpu_custom_call.1} parent=1 // pred_region
      %55 = dma.done [#allocation3], 128
    $region25: #{tpu_custom_call.1} parent=1 // pred_fallthru
      _
    // Predicated region
    $region26: #{tpu_custom_call.1} parent=1 // pred_check
      _
    $region27: #{tpu_custom_call.1} parent=1 // pred_check_branch
      %57 = sbr.rel (0) target = $region29
    $region28: #{tpu_custom_call.1} parent=1 // pred_region
      %58 = dma.done [#allocation6], 2048
    $region29: #{tpu_custom_call.1} parent=1 // pred_fallthru
      _
    // Predicated region
    $region30: #{tpu_custom_call.1} parent=1 // pred_check
      _
    $region31: #{tpu_custom_call.1} parent=1 // pred_check_branch
      %60 = sbr.rel (0) target = $region33
    $region32: #{tpu_custom_call.1} parent=1 // pred_region
      %61 = dma.done [#allocation6], 2048
    $region33: #{tpu_custom_call.1} parent=1 // pred_fallthru
      _
    %v63 = vld [vmem:[#allocation2] sm:$0xf]
    %v64 = vld [vmem:[#allocation2 + $0x4] sm:$0xf]
    %v65 = vld [vmem:[#allocation5] sm:$0xff]
    %v66 = vld [vmem:[#allocation5 + $0x8] sm:$0xff]
    %v67 = vld [vmem:[#allocation5 + $0x10] sm:$0xff]
    %v68 = vld [vmem:[#allocation5 + $0x18] sm:$0xff]
    %v69 = vld [vmem:[#allocation5 + $0x20] sm:$0xff]
    %v70 = vld [vmem:[#allocation5 + $0x28] sm:$0xff]
    %v71 = vld [vmem:[#allocation5 + $0x30] sm:$0xff]
    %v72 = vld [vmem:[#allocation5 + $0x38] sm:$0xff]
    %v73 = vld [vmem:[#allocation5 + $0x40] sm:$0xff]
    %v74 = vld [vmem:[#allocation5 + $0x48] sm:$0xff]
    %v75 = vld [vmem:[#allocation5 + $0x50] sm:$0xff]
    %v76 = vld [vmem:[#allocation5 + $0x58] sm:$0xff]
    %v77 = vld [vmem:[#allocation5 + $0x60] sm:$0xff]
    %v78 = vld [vmem:[#allocation5 + $0x68] sm:$0xff]
    %v79 = vld [vmem:[#allocation5 + $0x70] sm:$0xff]
    %v80 = vld [vmem:[#allocation5 + $0x78] sm:$0xff]
    %v81 = vld [vmem:[%s2] sm:$0x3]
    %v83 = vlaneseq
    %v84 = vshrl.u32 %v83, 7
    %v85 = vsub.s32 0, %v84
    %v86 = vrot.slane %v81, %v85
    %v87 = vlaneseq
    %v88 = vshrl.u32 %v87, 7
    %v89 = vsub.s32 1, %v88
    %v90 = vrot.slane %v81, %v89
    %v95 = vunpack.c.l.b16 %v63
    %v96 = vunpack.c.l.b16 %v64
    %v97 = vpack.c.b16 %v96, %v95
    %v115 = vunpack.c.l.b16 %v65
    %v116 = vunpack.c.h.b16 %v65
    %v117 = vunpack.c.l.b16 %v66
    %v118 = vunpack.c.h.b16 %v66
    %v119 = vunpack.c.l.b16 %v67
    %v120 = vunpack.c.h.b16 %v67
    %v121 = vunpack.c.l.b16 %v68
    %v122 = vunpack.c.h.b16 %v68
    %v123 = vunpack.c.l.b16 %v69
    %v124 = vunpack.c.h.b16 %v69
    %v125 = vunpack.c.l.b16 %v70
    %v126 = vunpack.c.h.b16 %v70
    %v127 = vunpack.c.l.b16 %v71
    %v128 = vunpack.c.h.b16 %v71
    %v129 = vunpack.c.l.b16 %v72
    %v130 = vunpack.c.h.b16 %v72
    %v131 = vunpack.c.l.b16 %v73
    %v132 = vunpack.c.h.b16 %v73
    %v133 = vunpack.c.l.b16 %v74
    %v134 = vunpack.c.h.b16 %v74
    %v135 = vunpack.c.l.b16 %v75
    %v136 = vunpack.c.h.b16 %v75
    %v137 = vunpack.c.l.b16 %v76
    %v138 = vunpack.c.h.b16 %v76
    %v139 = vunpack.c.l.b16 %v77
    %v140 = vunpack.c.h.b16 %v77
    %v141 = vunpack.c.l.b16 %v78
    %v142 = vunpack.c.h.b16 %v78
    %v143 = vunpack.c.l.b16 %v79
    %v144 = vunpack.c.h.b16 %v79
    %v145 = vunpack.c.l.b16 %v80
    %v146 = vunpack.c.h.b16 %v80
    %v147 = vpack.c.b16 %v117, %v115
    %v148 = vpack.c.b16 %v118, %v116
    %v149 = vpack.c.b16 %v121, %v119
    %v150 = vpack.c.b16 %v122, %v120
    %v151 = vpack.c.b16 %v125, %v123
    %v152 = vpack.c.b16 %v126, %v124
    %v153 = vpack.c.b16 %v129, %v127
    %v154 = vpack.c.b16 %v130, %v128
    %v155 = vpack.c.b16 %v133, %v131
    %v156 = vpack.c.b16 %v134, %v132
    %v157 = vpack.c.b16 %v137, %v135
    %v158 = vpack.c.b16 %v138, %v136
    %v159 = vpack.c.b16 %v141, %v139
    %v160 = vpack.c.b16 %v142, %v140
    %v161 = vpack.c.b16 %v145, %v143
    %v162 = vpack.c.b16 %v146, %v144
    %179 = vmatprep.subr.bf16.mxu0 %v162
    %180 = vmatpush1.bf16.msra.mxu0 %v161
    %181 = vmatprep.subr.bf16.mxu0 %v160
    %182 = vmatpush1.bf16.msra.mxu0 %v159
    %183 = vmatprep.subr.bf16.mxu0 %v158
    %184 = vmatpush1.bf16.msra.mxu0 %v157
    %185 = vmatprep.subr.bf16.mxu0 %v156
    %186 = vmatpush1.bf16.msra.mxu0 %v155
    %187 = vmatprep.subr.bf16.mxu0 %v154
    %188 = vmatpush1.bf16.msra.mxu0 %v153
    %189 = vmatprep.subr.bf16.mxu0 %v152
    %190 = vmatpush1.bf16.msra.mxu0 %v151
    %191 = vmatprep.subr.bf16.mxu0 %v150
    %192 = vmatpush1.bf16.msra.mxu0 %v149
    %193 = vmatprep.subr.bf16.mxu0 %v148
    %194 = vmatpush1.bf16.msra.mxu0 %v147
    %195 = vmatprep.subr.bf16.mxu0 0
    %196 = vmatpush2.bf16.msra.mxu0 0
    %197 = vmatprep.subr.bf16.mxu0 0
    %198 = vmatpush2.bf16.msra.mxu0 0
    %199 = vmatprep.subr.bf16.mxu0 0
    %200 = vmatpush2.bf16.msra.mxu0 0
    %201 = vmatprep.subr.bf16.mxu0 0
    %202 = vmatpush2.bf16.msra.mxu0 0
    %203 = vmatprep.subr.bf16.mxu0 0
    %204 = vmatpush2.bf16.msra.mxu0 0
    %205 = vmatprep.subr.bf16.mxu0 0
    %206 = vmatpush2.bf16.msra.mxu0 0
    %207 = vmatprep.subr.bf16.mxu0 0
    %208 = vmatpush2.bf16.msra.mxu0 0
    %209 = vmatprep.subr.bf16.mxu0 0
    %210 = vmatpush2.bf16.msra.mxu0 0
    %211 = vmatprep.mubr.bf16.mxu0 0
    %212 = vmatmul.mubr.bf16.gmra.mxu0 %v97
    %v213 = vpop.f32.mrf.mxu0
    %v214 = vadd.f32 %v86, %v213
    %v215 = vpop.f32.mrf.mxu0
    %v216 = vadd.f32 %v90, %v215
    %v217 = vpop.f32.mrf.mxu0
    %v218 = vadd.f32 %v86, %v217
    %v219 = vpop.f32.mrf.mxu0
    %v220 = vadd.f32 %v90, %v219
    %221 = vdwg.mxu0
    %vm222 = vcmp.gt.f32.partialorder %v214, 0.0
    %vm223 = vcmp.gt.f32.partialorder %v216, 0.0
    %vm224 = vcmp.gt.f32.partialorder %v218, 0.0
    %vm225 = vcmp.gt.f32.partialorder %v220, 0.0
    %v226 = vmul.f32 %v214, 0.01
    %v227 = vmul.f32 %v216, 0.01
    %v228 = vmul.f32 %v218, 0.01
    %v229 = vmul.f32 %v220, 0.01
    %v230 = vsel %vm222, %v214, %v226
    %v231 = vsel %vm223, %v216, %v227
    %v232 = vsel %vm224, %v218, %v228
    %v233 = vsel %vm225, %v220, %v229
    %v234 = vpack.c.bf16 %v232, %v230
    %v235 = vpack.c.bf16 %v233, %v231
    %v236 = vld [vmem:[#allocation7] sm:$0xf]
    %v237 = vld [vmem:[#allocation7 + $0x4] sm:$0xf]
    %v238 = vld [vmem:[#allocation7 + $0x8] sm:$0xf]
    %v239 = vld [vmem:[#allocation7 + $0xc] sm:$0xf]
    %v240 = vld [vmem:[#allocation7 + $0x10] sm:$0xf]
    %v241 = vld [vmem:[#allocation7 + $0x14] sm:$0xf]
    %v242 = vld [vmem:[#allocation7 + $0x18] sm:$0xf]
    %v243 = vld [vmem:[#allocation7 + $0x1c] sm:$0xf]
    %v244 = vld [vmem:[#allocation7 + $0x20] sm:$0xf]
    %v245 = vld [vmem:[#allocation7 + $0x24] sm:$0xf]
    %v246 = vld [vmem:[#allocation7 + $0x28] sm:$0xf]
    %v247 = vld [vmem:[#allocation7 + $0x2c] sm:$0xf]
    %v248 = vld [vmem:[#allocation7 + $0x30] sm:$0xf]
    %v249 = vld [vmem:[#allocation7 + $0x34] sm:$0xf]
    %v250 = vld [vmem:[#allocation7 + $0x38] sm:$0xf]
    %v251 = vld [vmem:[#allocation7 + $0x3c] sm:$0xf]
    %v252 = vld [vmem:[#allocation7 + $0x40] sm:$0xf]
    %v253 = vld [vmem:[#allocation7 + $0x44] sm:$0xf]
    %v254 = vld [vmem:[#allocation7 + $0x48] sm:$0xf]
    %v255 = vld [vmem:[#allocation7 + $0x4c] sm:$0xf]
    %v256 = vld [vmem:[#allocation7 + $0x50] sm:$0xf]
    %v257 = vld [vmem:[#allocation7 + $0x54] sm:$0xf]
    %v258 = vld [vmem:[#allocation7 + $0x58] sm:$0xf]
    %v259 = vld [vmem:[#allocation7 + $0x5c] sm:$0xf]
    %v260 = vld [vmem:[#allocation7 + $0x60] sm:$0xf]
    %v261 = vld [vmem:[#allocation7 + $0x64] sm:$0xf]
    %v262 = vld [vmem:[#allocation7 + $0x68] sm:$0xf]
    %v263 = vld [vmem:[#allocation7 + $0x6c] sm:$0xf]
    %v264 = vld [vmem:[#allocation7 + $0x70] sm:$0xf]
    %v265 = vld [vmem:[#allocation7 + $0x74] sm:$0xf]
    %v266 = vld [vmem:[#allocation7 + $0x78] sm:$0xf]
    %v267 = vld [vmem:[#allocation7 + $0x7c] sm:$0xf]
    %v268 = vld [vmem:[%s4] sm:$0x1]
    %v270 = vlaneseq
    %v271 = vshrl.u32 %v270, 7
    %v272 = vsub.s32 0, %v271
    %v273 = vrot.slane %v268, %v272
    %v307 = vunpack.c.l.b16 %v236
    %v308 = vunpack.c.l.b16 %v237
    %v309 = vunpack.c.l.b16 %v238
    %v310 = vunpack.c.l.b16 %v239
    %v311 = vunpack.c.l.b16 %v240
    %v312 = vunpack.c.l.b16 %v241
    %v313 = vunpack.c.l.b16 %v242
    %v314 = vunpack.c.l.b16 %v243
    %v315 = vunpack.c.l.b16 %v244
    %v316 = vunpack.c.l.b16 %v245
    %v317 = vunpack.c.l.b16 %v246
    %v318 = vunpack.c.l.b16 %v247
    %v319 = vunpack.c.l.b16 %v248
    %v320 = vunpack.c.l.b16 %v249
    %v321 = vunpack.c.l.b16 %v250
    %v322 = vunpack.c.l.b16 %v251
    %v323 = vunpack.c.l.b16 %v252
    %v324 = vunpack.c.l.b16 %v253
    %v325 = vunpack.c.l.b16 %v254
    %v326 = vunpack.c.l.b16 %v255
    %v327 = vunpack.c.l.b16 %v256
    %v328 = vunpack.c.l.b16 %v257
    %v329 = vunpack.c.l.b16 %v258
    %v330 = vunpack.c.l.b16 %v259
    %v331 = vunpack.c.l.b16 %v260
    %v332 = vunpack.c.l.b16 %v261
    %v333 = vunpack.c.l.b16 %v262
    %v334 = vunpack.c.l.b16 %v263
    %v335 = vunpack.c.l.b16 %v264
    %v336 = vunpack.c.l.b16 %v265
    %v337 = vunpack.c.l.b16 %v266
    %v338 = vunpack.c.l.b16 %v267
    %v339 = vpack.c.b16 %v308, %v307
    %v340 = vpack.c.b16 %v310, %v309
    %v341 = vpack.c.b16 %v312, %v311
    %v342 = vpack.c.b16 %v314, %v313
    %v343 = vpack.c.b16 %v316, %v315
    %v344 = vpack.c.b16 %v318, %v317
    %v345 = vpack.c.b16 %v320, %v319
    %v346 = vpack.c.b16 %v322, %v321
    %v347 = vpack.c.b16 %v324, %v323
    %v348 = vpack.c.b16 %v326, %v325
    %v349 = vpack.c.b16 %v328, %v327
    %v350 = vpack.c.b16 %v330, %v329
    %v351 = vpack.c.b16 %v332, %v331
    %v352 = vpack.c.b16 %v334, %v333
    %v353 = vpack.c.b16 %v336, %v335
    %v354 = vpack.c.b16 %v338, %v337
    %371 = vmatprep.subr.bf16.mxu0 0
    %372 = vmatpush1.bf16.msra.mxu0 %v346
    %373 = vmatprep.subr.bf16.mxu0 0
    %374 = vmatpush1.bf16.msra.mxu0 %v345
    %375 = vmatprep.subr.bf16.mxu0 0
    %376 = vmatpush1.bf16.msra.mxu0 %v344
    %377 = vmatprep.subr.bf16.mxu0 0
    %378 = vmatpush1.bf16.msra.mxu0 %v343
    %379 = vmatprep.subr.bf16.mxu0 0
    %380 = vmatpush1.bf16.msra.mxu0 %v342
    %381 = vmatprep.subr.bf16.mxu0 0
    %382 = vmatpush1.bf16.msra.mxu0 %v341
    %383 = vmatprep.subr.bf16.mxu0 0
    %384 = vmatpush1.bf16.msra.mxu0 %v340
    %385 = vmatprep.subr.bf16.mxu0 0
    %386 = vmatpush1.bf16.msra.mxu0 %v339
    %387 = vmatprep.subr.bf16.mxu0 0
    %388 = vmatpush2.bf16.msra.mxu0 %v354
    %389 = vmatprep.subr.bf16.mxu0 0
    %390 = vmatpush2.bf16.msra.mxu0 %v353
    %391 = vmatprep.subr.bf16.mxu0 0
    %392 = vmatpush2.bf16.msra.mxu0 %v352
    %393 = vmatprep.subr.bf16.mxu0 0
    %394 = vmatpush2.bf16.msra.mxu0 %v351
    %395 = vmatprep.subr.bf16.mxu0 0
    %396 = vmatpush2.bf16.msra.mxu0 %v350
    %397 = vmatprep.subr.bf16.mxu0 0
    %398 = vmatpush2.bf16.msra.mxu0 %v349
    %399 = vmatprep.subr.bf16.mxu0 0
    %400 = vmatpush2.bf16.msra.mxu0 %v348
    %401 = vmatprep.subr.bf16.mxu0 0
    %402 = vmatpush2.bf16.msra.mxu0 %v347
    %403 = vmatprep.mubr.bf16.mxu0 %v235
    %404 = vmatmul.mubr.bf16.gmra.mxu0 %v234
    %v405 = vpop.f32.mrf.mxu0
    %v406 = vadd.f32 %v273, %v405
    %v407 = vpop.f32.mrf.mxu0
    %v408 = vpop.f32.mrf.mxu0
    %v409 = vadd.f32 %v273, %v408
    %v410 = vpop.f32.mrf.mxu0
    %411 = vdwg.mxu0
    %412 = vst [vmem:[#allocation8] sm:$0xff] %v406
    %413 = vst [vmem:[#allocation8 + $0x8] sm:$0xff] %v409
    // Predicated region
    $region34: #{tpu_custom_call.1} parent=1 // pred_check
      _
    $region35: #{tpu_custom_call.1} parent=1 // pred_check_branch
      %415 = sbr.rel (0) target = $region37
    $region36: #{tpu_custom_call.1} parent=1 // pred_region
      %s417 = ssub.s32 256, 256
      %418 = vsyncadd [#allocation4], %s417
      %s419 = sshll.u32 [#allocation8], 4
      %s420 = int_to_ptr.vmem [resolvable:$true] %s419
      %425 = dma.vmem_to_hbm [thread:$0]  %s420, 256, %s5, [#allocation4], 128, 128, 8
    $region37: #{tpu_custom_call.1} parent=1 // pred_fallthru
      _
    // Predicated region
    $region38: #{tpu_custom_call.1} parent=1 // pred_check
      _
    $region39: #{tpu_custom_call.1} parent=1 // pred_check_branch
      %427 = sbr.rel (0) target = $region41
    $region40: #{tpu_custom_call.1} parent=1 // pred_region
      %428 = dma.done [#allocation4], 256
    $region41: #{tpu_custom_call.1} parent=1 // pred_fallthru
      _
    %429 = vsyncpa [#allocation3], 1
    %430 = vsyncpa [#allocation6], 1
    %431 = vsyncpa [#allocation4], 1

// kernel: tpu_custom_call.1
$region0: #{tpu_custom_call.1}
  #allocation0 [shape = 'u32[]', space=smem, size = 0x4, offset = 0x4, fixed_abs, tag = 'smem constant byte address 0x4 - core index']
  #allocation1 [shape = 'u32[144,128]{1,0:T(1,128)}', space=vmem, size = 0x12000, scoped, tag = 'internal scratch']
  %s0 = inlined_call_operand.hbm [shape: bf16[16,128], index: 0, kind: input, shape index: {}]
  %s1 = inlined_call_operand.hbm [shape: bf16[128,256], index: 1, kind: input, shape index: {}]
  %s2 = inlined_call_operand.vmem [shape: f32[1,256], index: 2, kind: input, shape index: {}]
  %s3 = inlined_call_operand.hbm [shape: bf16[256,128], index: 3, kind: input, shape index: {}]
  %s4 = inlined_call_operand.vmem [shape: f32[1,128], index: 4, kind: input, shape index: {}]
  %s5 = inlined_call_operand.hbm [shape: f32[16,128], index: 5, kind: output, shape index: {}]
  %s6 = sld [smem:[#allocation0]]
  $region42: #{tpu_custom_call.1} parent=0
    _
  %s8 = ssub.s32 1, %s6
  %s9 = scalar_select 0, %s8, %s6
  $region1: #{tpu_custom_call.1} parent=0
    #allocation2 [shape = 'u8[4096]{0}', space=vmem, size = 0x1000, scoped, tag = 'input window, operand 0, single buffered']
    #allocation3 [shape = 's32[1]{0}', space=sflag, size = 0x4, scoped, tag = 'scoped memory for tpu_custom_call.1']
    #allocation4 [shape = 's32[1]{0}', space=sflag, size = 0x4, scoped, tag = 'scoped memory for tpu_custom_call.1']
    #allocation5 [shape = 'u8[65536]{0}', space=vmem, size = 0x10000, scoped, tag = 'input window, operand 1, single buffered']
    #allocation6 [shape = 's32[1]{0}', space=sflag, size = 0x4, scoped, tag = 'scoped memory for tpu_custom_call.1']
    #allocation7 [shape = 'u8[65536]{0}', space=vmem, size = 0x10000, scoped, tag = 'input window, operand 3, single buffered']
    #allocation8 [shape = 'u8[8192]{0}', space=vmem, size = 0x2000, scoped, tag = 'output window, operand 0, single buffered']
    %10 = vsyncpa [#allocation3], 0
    %11 = vsyncpa [#allocation6], 0
    %12 = vsyncpa [#allocation4], 0
    // Predicated region
    $region2: #{tpu_custom_call.1} parent=1 // pred_check
      _
    $region3: #{tpu_custom_call.1} parent=1 // pred_check_branch
      %14 = sbr.rel (0) target = $region5
    $region4: #{tpu_custom_call.1} parent=1 // pred_region
      %s16 = ssub.s32 128, 128
      %17 = vsyncadd [#allocation3], %s16
      %s18 = sshll.u32 [#allocation2], 4
      %s19 = int_to_ptr.vmem [resolvable:$true] %s18
      %24 = dma.hbm_to_vmem [thread:$0]  %s0, 128, %s19, [#allocation3], 64, 64, 4
    $region5: #{tpu_custom_call.1} parent=1 // pred_fallthru
      _
    // Predicated region
    $region6: #{tpu_custom_call.1} parent=1 // pred_check
      _
    $region7: #{tpu_custom_call.1} parent=1 // pred_check_branch
      %26 = sbr.rel (0) target = $region9
    $region8: #{tpu_custom_call.1} parent=1 // pred_region
      %s28 = ssub.s32 2048, 2048
      %29 = vsyncadd [#allocation6], %s28
      %s30 = sshll.u32 [#allocation5], 4
      %s31 = int_to_ptr.vmem [resolvable:$true] %s30
      %36 = dma.hbm_to_vmem [thread:$0]  %s1, 2048, %s31, [#allocation6], 128, 128, 8
    $region9: #{tpu_custom_call.1} parent=1 // pred_fallthru
      _
    // Predicated region
    $region10: #{tpu_custom_call.1} parent=1 // pred_check
      _
    $region11: #{tpu_custom_call.1} parent=1 // pred_check_branch
      %38 = sbr.rel (0) target = $region13
    $region12: #{tpu_custom_call.1} parent=1 // pred_region
      _
    $region13: #{tpu_custom_call.1} parent=1 // pred_fallthru
      _
    // Predicated region
    $region14: #{tpu_custom_call.1} parent=1 // pred_check
      _
    $region15: #{tpu_custom_call.1} parent=1 // pred_check_branch
      %40 = sbr.rel (0) target = $region17
    $region16: #{tpu_custom_call.1} parent=1 // pred_region
      %s42 = ssub.s32 2048, 2048
      %43 = vsyncadd [#allocation6], %s42
      %s44 = sshll.u32 [#allocation7], 4
      %s45 = int_to_ptr.vmem [resolvable:$true] %s44
      %50 = dma.hbm_to_vmem [thread:$0]  %s3, 2048, %s45, [#allocation6], 64, 64, 4
    $region17: #{tpu_custom_call.1} parent=1 // pred_fallthru
      _
    // Predicated region
    $region18: #{tpu_custom_call.1} parent=1 // pred_check
      _
    $region19: #{tpu_custom_call.1} parent=1 // pred_check_branch
      %52 = sbr.rel (0) target = $region21
    $region20: #{tpu_custom_call.1} parent=1 // pred_region
      _
    $region21: #{tpu_custom_call.1} parent=1 // pred_fallthru
      _
    // Predicated region
    $region22: #{tpu_custom_call.1} parent=1 // pred_check
      _
    $region23: #{tpu_custom_call.1} parent=1 // pred_check_branch
      %54 = sbr.rel (0) target = $region25
    $region24: #{tpu_custom_call.1} parent=1 // pred_region
      %55 = dma.done [#allocation3], 128
    $region25: #{tpu_custom_call.1} parent=1 // pred_fallthru
      _
    // Predicated region
    $region26: #{tpu_custom_call.1} parent=1 // pred_check
      _
    $region27: #{tpu_custom_call.1} parent=1 // pred_check_branch
      %57 = sbr.rel (0) target = $region29
    $region28: #{tpu_custom_call.1} parent=1 // pred_region
      %58 = dma.done [#allocation6], 2048
    $region29: #{tpu_custom_call.1} parent=1 // pred_fallthru
      _
    // Predicated region
    $region30: #{tpu_custom_call.1} parent=1 // pred_check
      _
    $region31: #{tpu_custom_call.1} parent=1 // pred_check_branch
      %60 = sbr.rel (0) target = $region33
    $region32: #{tpu_custom_call.1} parent=1 // pred_region
      %61 = dma.done [#allocation6], 2048
    $region33: #{tpu_custom_call.1} parent=1 // pred_fallthru
      _
    %v63 = vld [vmem:[#allocation2] sm:$0xf]
    %v64 = vld [vmem:[#allocation2 + $0x4] sm:$0xf]
    %v65 = vld [vmem:[#allocation5] sm:$0xff]
    %v66 = vld [vmem:[#allocation5 + $0x8] sm:$0xff]
    %v67 = vld [vmem:[#allocation5 + $0x10] sm:$0xff]
    %v68 = vld [vmem:[#allocation5 + $0x18] sm:$0xff]
    %v69 = vld [vmem:[#allocation5 + $0x20] sm:$0xff]
    %v70 = vld [vmem:[#allocation5 + $0x28] sm:$0xff]
    %v71 = vld [vmem:[#allocation5 + $0x30] sm:$0xff]
    %v72 = vld [vmem:[#allocation5 + $0x38] sm:$0xff]
    %v73 = vld [vmem:[#allocation5 + $0x40] sm:$0xff]
    %v74 = vld [vmem:[#allocation5 + $0x48] sm:$0xff]
    %v75 = vld [vmem:[#allocation5 + $0x50] sm:$0xff]
    %v76 = vld [vmem:[#allocation5 + $0x58] sm:$0xff]
    %v77 = vld [vmem:[#allocation5 + $0x60] sm:$0xff]
    %v78 = vld [vmem:[#allocation5 + $0x68] sm:$0xff]
    %v79 = vld [vmem:[#allocation5 + $0x70] sm:$0xff]
    %v80 = vld [vmem:[#allocation5 + $0x78] sm:$0xff]
    %v81 = vld [vmem:[%s2] sm:$0x3]
    %v83 = vlaneseq
    %v84 = vshrl.u32 %v83, 7
    %v85 = vsub.s32 0, %v84
    %v86 = vrot.slane %v81, %v85
    %v87 = vlaneseq
    %v88 = vshrl.u32 %v87, 7
    %v89 = vsub.s32 1, %v88
    %v90 = vrot.slane %v81, %v89
    %v95 = vunpack.c.l.b16 %v63
    %v96 = vunpack.c.l.b16 %v64
    %v97 = vpack.c.b16 %v96, %v95
    %v115 = vunpack.c.l.b16 %v65
    %v116 = vunpack.c.h.b16 %v65
    %v117 = vunpack.c.l.b16 %v66
    %v118 = vunpack.c.h.b16 %v66
    %v119 = vunpack.c.l.b16 %v67
    %v120 = vunpack.c.h.b16 %v67
    %v121 = vunpack.c.l.b16 %v68
    %v122 = vunpack.c.h.b16 %v68
    %v123 = vunpack.c.l.b16 %v69
    %v124 = vunpack.c.h.b16 %v69
    %v125 = vunpack.c.l.b16 %v70
    %v126 = vunpack.c.h.b16 %v70
    %v127 = vunpack.c.l.b16 %v71
    %v128 = vunpack.c.h.b16 %v71
    %v129 = vunpack.c.l.b16 %v72
    %v130 = vunpack.c.h.b16 %v72
    %v131 = vunpack.c.l.b16 %v73
    %v132 = vunpack.c.h.b16 %v73
    %v133 = vunpack.c.l.b16 %v74
    %v134 = vunpack.c.h.b16 %v74
    %v135 = vunpack.c.l.b16 %v75
    %v136 = vunpack.c.h.b16 %v75
    %v137 = vunpack.c.l.b16 %v76
    %v138 = vunpack.c.h.b16 %v76
    %v139 = vunpack.c.l.b16 %v77
    %v140 = vunpack.c.h.b16 %v77
    %v141 = vunpack.c.l.b16 %v78
    %v142 = vunpack.c.h.b16 %v78
    %v143 = vunpack.c.l.b16 %v79
    %v144 = vunpack.c.h.b16 %v79
    %v145 = vunpack.c.l.b16 %v80
    %v146 = vunpack.c.h.b16 %v80
    %v147 = vpack.c.b16 %v117, %v115
    %v148 = vpack.c.b16 %v118, %v116
    %v149 = vpack.c.b16 %v121, %v119
    %v150 = vpack.c.b16 %v122, %v120
    %v151 = vpack.c.b16 %v125, %v123
    %v152 = vpack.c.b16 %v126, %v124
    %v153 = vpack.c.b16 %v129, %v127
    %v154 = vpack.c.b16 %v130, %v128
    %v155 = vpack.c.b16 %v133, %v131
    %v156 = vpack.c.b16 %v134, %v132
    %v157 = vpack.c.b16 %v137, %v135
    %v158 = vpack.c.b16 %v138, %v136
    %v159 = vpack.c.b16 %v141, %v139
    %v160 = vpack.c.b16 %v142, %v140
    %v161 = vpack.c.b16 %v145, %v143
    %v162 = vpack.c.b16 %v146, %v144
    %179 = vmatprep.subr.bf16.mxu0 %v162
    %180 = vmatpush1.bf16.msra.mxu0 %v161
    %181 = vmatprep.subr.bf16.mxu0 %v160
    %182 = vmatpush1.bf16.msra.mxu0 %v159
    %183 = vmatprep.subr.bf16.mxu0 %v158
    %184 = vmatpush1.bf16.msra.mxu0 %v157
    %185 = vmatprep.subr.bf16.mxu0 %v156
    %186 = vmatpush1.bf16.msra.mxu0 %v155
    %187 = vmatprep.subr.bf16.mxu0 %v154
    %188 = vmatpush1.bf16.msra.mxu0 %v153
    %189 = vmatprep.subr.bf16.mxu0 %v152
    %190 = vmatpush1.bf16.msra.mxu0 %v151
    %191 = vmatprep.subr.bf16.mxu0 %v150
    %192 = vmatpush1.bf16.msra.mxu0 %v149
    %193 = vmatprep.subr.bf16.mxu0 %v148
    %194 = vmatpush1.bf16.msra.mxu0 %v147
    %195 = vmatprep.subr.bf16.mxu0 0
    %196 = vmatpush2.bf16.msra.mxu0 0
    %197 = vmatprep.subr.bf16.mxu0 0
    %198 = vmatpush2.bf16.msra.mxu0 0
    %199 = vmatprep.subr.bf16.mxu0 0
    %200 = vmatpush2.bf16.msra.mxu0 0
    %201 = vmatprep.subr.bf16.mxu0 0
    %202 = vmatpush2.bf16.msra.mxu0 0
    %203 = vmatprep.subr.bf16.mxu0 0
    %204 = vmatpush2.bf16.msra.mxu0 0
    %205 = vmatprep.subr.bf16.mxu0 0
    %206 = vmatpush2.bf16.msra.mxu0 0
    %207 = vmatprep.subr.bf16.mxu0 0
    %208 = vmatpush2.bf16.msra.mxu0 0
    %209 = vmatprep.subr.bf16.mxu0 0
    %210 = vmatpush2.bf16.msra.mxu0 0
    %211 = vmatprep.mubr.bf16.mxu0 0
    %212 = vmatmul.mubr.bf16.gmra.mxu0 %v97
    %v213 = vpop.f32.mrf.mxu0
    %v214 = vadd.f32 %v86, %v213
    %v215 = vpop.f32.mrf.mxu0
    %v216 = vadd.f32 %v90, %v215
    %v217 = vpop.f32.mrf.mxu0
    %v218 = vadd.f32 %v86, %v217
    %v219 = vpop.f32.mrf.mxu0
    %v220 = vadd.f32 %v90, %v219
    %221 = vdwg.mxu0
    %vm222 = vcmp.gt.f32.partialorder %v214, 0.0
    %vm223 = vcmp.gt.f32.partialorder %v216, 0.0
    %vm224 = vcmp.gt.f32.partialorder %v218, 0.0
    %vm225 = vcmp.gt.f32.partialorder %v220, 0.0
    %v226 = vmul.f32 %v214, 0.01
    %v227 = vmul.f32 %v216, 0.01
    %v228 = vmul.f32 %v218, 0.01
    %v229 = vmul.f32 %v220, 0.01
    %v230 = vsel %vm222, %v214, %v226
    %v231 = vsel %vm223, %v216, %v227
    %v232 = vsel %vm224, %v218, %v228
    %v233 = vsel %vm225, %v220, %v229
    %v234 = vpack.c.bf16 %v232, %v230
    %v235 = vpack.c.bf16 %v233, %v231
    %v236 = vld [vmem:[#allocation7] sm:$0xf]
    %v237 = vld [vmem:[#allocation7 + $0x4] sm:$0xf]
    %v238 = vld [vmem:[#allocation7 + $0x8] sm:$0xf]
    %v239 = vld [vmem:[#allocation7 + $0xc] sm:$0xf]
    %v240 = vld [vmem:[#allocation7 + $0x10] sm:$0xf]
    %v241 = vld [vmem:[#allocation7 + $0x14] sm:$0xf]
    %v242 = vld [vmem:[#allocation7 + $0x18] sm:$0xf]
    %v243 = vld [vmem:[#allocation7 + $0x1c] sm:$0xf]
    %v244 = vld [vmem:[#allocation7 + $0x20] sm:$0xf]
    %v245 = vld [vmem:[#allocation7 + $0x24] sm:$0xf]
    %v246 = vld [vmem:[#allocation7 + $0x28] sm:$0xf]
    %v247 = vld [vmem:[#allocation7 + $0x2c] sm:$0xf]
    %v248 = vld [vmem:[#allocation7 + $0x30] sm:$0xf]
    %v249 = vld [vmem:[#allocation7 + $0x34] sm:$0xf]
    %v250 = vld [vmem:[#allocation7 + $0x38] sm:$0xf]
    %v251 = vld [vmem:[#allocation7 + $0x3c] sm:$0xf]
    %v252 = vld [vmem:[#allocation7 + $0x40] sm:$0xf]
    %v253 = vld [vmem:[#allocation7 + $0x44] sm:$0xf]
    %v254 = vld [vmem:[#allocation7 + $0x48] sm:$0xf]
    %v255 = vld [vmem:[#allocation7 + $0x4c] sm:$0xf]
    %v256 = vld [vmem:[#allocation7 + $0x50] sm:$0xf]
    %v257 = vld [vmem:[#allocation7 + $0x54] sm:$0xf]
    %v258 = vld [vmem:[#allocation7 + $0x58] sm:$0xf]
    %v259 = vld [vmem:[#allocation7 + $0x5c] sm:$0xf]
    %v260 = vld [vmem:[#allocation7 + $0x60] sm:$0xf]
    %v261 = vld [vmem:[#allocation7 + $0x64] sm:$0xf]
    %v262 = vld [vmem:[#allocation7 + $0x68] sm:$0xf]
    %v263 = vld [vmem:[#allocation7 + $0x6c] sm:$0xf]
    %v264 = vld [vmem:[#allocation7 + $0x70] sm:$0xf]
    %v265 = vld [vmem:[#allocation7 + $0x74] sm:$0xf]
    %v266 = vld [vmem:[#allocation7 + $0x78] sm:$0xf]
    %v267 = vld [vmem:[#allocation7 + $0x7c] sm:$0xf]
    %v268 = vld [vmem:[%s4] sm:$0x1]
    %v270 = vlaneseq
    %v271 = vshrl.u32 %v270, 7
    %v272 = vsub.s32 0, %v271
    %v273 = vrot.slane %v268, %v272
    %v307 = vunpack.c.l.b16 %v236
    %v308 = vunpack.c.l.b16 %v237
    %v309 = vunpack.c.l.b16 %v238
    %v310 = vunpack.c.l.b16 %v239
    %v311 = vunpack.c.l.b16 %v240
    %v312 = vunpack.c.l.b16 %v241
    %v313 = vunpack.c.l.b16 %v242
    %v314 = vunpack.c.l.b16 %v243
    %v315 = vunpack.c.l.b16 %v244
    %v316 = vunpack.c.l.b16 %v245
    %v317 = vunpack.c.l.b16 %v246
    %v318 = vunpack.c.l.b16 %v247
    %v319 = vunpack.c.l.b16 %v248
    %v320 = vunpack.c.l.b16 %v249
    %v321 = vunpack.c.l.b16 %v250
    %v322 = vunpack.c.l.b16 %v251
    %v323 = vunpack.c.l.b16 %v252
    %v324 = vunpack.c.l.b16 %v253
    %v325 = vunpack.c.l.b16 %v254
    %v326 = vunpack.c.l.b16 %v255
    %v327 = vunpack.c.l.b16 %v256
    %v328 = vunpack.c.l.b16 %v257
    %v329 = vunpack.c.l.b16 %v258
    %v330 = vunpack.c.l.b16 %v259
    %v331 = vunpack.c.l.b16 %v260
    %v332 = vunpack.c.l.b16 %v261
    %v333 = vunpack.c.l.b16 %v262
    %v334 = vunpack.c.l.b16 %v263
    %v335 = vunpack.c.l.b16 %v264
    %v336 = vunpack.c.l.b16 %v265
    %v337 = vunpack.c.l.b16 %v266
    %v338 = vunpack.c.l.b16 %v267
    %v339 = vpack.c.b16 %v308, %v307
    %v340 = vpack.c.b16 %v310, %v309
    %v341 = vpack.c.b16 %v312, %v311
    %v342 = vpack.c.b16 %v314, %v313
    %v343 = vpack.c.b16 %v316, %v315
    %v344 = vpack.c.b16 %v318, %v317
    %v345 = vpack.c.b16 %v320, %v319
    %v346 = vpack.c.b16 %v322, %v321
    %v347 = vpack.c.b16 %v324, %v323
    %v348 = vpack.c.b16 %v326, %v325
    %v349 = vpack.c.b16 %v328, %v327
    %v350 = vpack.c.b16 %v330, %v329
    %v351 = vpack.c.b16 %v332, %v331
    %v352 = vpack.c.b16 %v334, %v333
    %v353 = vpack.c.b16 %v336, %v335
    %v354 = vpack.c.b16 %v338, %v337
    %371 = vmatprep.subr.bf16.mxu0 0
    %372 = vmatpush1.bf16.msra.mxu0 %v346
    %373 = vmatprep.subr.bf16.mxu0 0
    %374 = vmatpush1.bf16.msra.mxu0 %v345
    %375 = vmatprep.subr.bf16.mxu0 0
    %376 = vmatpush1.bf16.msra.mxu0 %v344
    %377 = vmatprep.subr.bf16.mxu0 0
    %378 = vmatpush1.bf16.msra.mxu0 %v343
    %379 = vmatprep.subr.bf16.mxu0 0
    %380 = vmatpush1.bf16.msra.mxu0 %v342
    %381 = vmatprep.subr.bf16.mxu0 0
    %382 = vmatpush1.bf16.msra.mxu0 %v341
    %383 = vmatprep.subr.bf16.mxu0 0
    %384 = vmatpush1.bf16.msra.mxu0 %v340
    %385 = vmatprep.subr.bf16.mxu0 0
    %386 = vmatpush1.bf16.msra.mxu0 %v339
    %387 = vmatprep.subr.bf16.mxu0 0
    %388 = vmatpush2.bf16.msra.mxu0 %v354
    %389 = vmatprep.subr.bf16.mxu0 0
    %390 = vmatpush2.bf16.msra.mxu0 %v353
    %391 = vmatprep.subr.bf16.mxu0 0
    %392 = vmatpush2.bf16.msra.mxu0 %v352
    %393 = vmatprep.subr.bf16.mxu0 0
    %394 = vmatpush2.bf16.msra.mxu0 %v351
    %395 = vmatprep.subr.bf16.mxu0 0
    %396 = vmatpush2.bf16.msra.mxu0 %v350
    %397 = vmatprep.subr.bf16.mxu0 0
    %398 = vmatpush2.bf16.msra.mxu0 %v349
    %399 = vmatprep.subr.bf16.mxu0 0
    %400 = vmatpush2.bf16.msra.mxu0 %v348
    %401 = vmatprep.subr.bf16.mxu0 0
    %402 = vmatpush2.bf16.msra.mxu0 %v347
    %403 = vmatprep.mubr.bf16.mxu0 %v235
    %404 = vmatmul.mubr.bf16.gmra.mxu0 %v234
    %v405 = vpop.f32.mrf.mxu0
    %v406 = vadd.f32 %v273, %v405
    %v407 = vpop.f32.mrf.mxu0
    %v408 = vpop.f32.mrf.mxu0
    %v409 = vadd.f32 %v273, %v408
    %v410 = vpop.f32.mrf.mxu0
    %411 = vdwg.mxu0
    %412 = vst [vmem:[#allocation8] sm:$0xff] %v406
    %413 = vst [vmem:[#allocation8 + $0x8] sm:$0xff] %v409
    // Predicated region
    $region34: #{tpu_custom_call.1} parent=1 // pred_check
      _
    $region35: #{tpu_custom_call.1} parent=1 // pred_check_branch
      %415 = sbr.rel (0) target = $region37
    $region36: #{tpu_custom_call.1} parent=1 // pred_region
      %s417 = ssub.s32 256, 256
      %418 = vsyncadd [#allocation4], %s417
      %s419 = sshll.u32 [#allocation8], 4
      %s420 = int_to_ptr.vmem [resolvable:$true] %s419
      %425 = dma.vmem_to_hbm [thread:$0]  %s420, 256, %s5, [#allocation4], 128, 128, 8
    $region37: #{tpu_custom_call.1} parent=1 // pred_fallthru
      _
    // Predicated region
    $region38: #{tpu_custom_call.1} parent=1 // pred_check
      _
    $region39: #{tpu_custom_call.1} parent=1 // pred_check_branch
      %427 = sbr.rel (0) target = $region41
    $region40: #{tpu_custom_call.1} parent=1 // pred_region
      %428 = dma.done [#allocation4], 256
    $region41: #{tpu_custom_call.1} parent=1 // pred_fallthru
      _
    %429 = vsyncpa [#allocation3], 1
    %430 = vsyncpa [#allocation6], 1
    %431 = vsyncpa [#allocation4], 1

</llo_original>
